<compile_context>
chip_gen: v6e
topology: v6e:2x2x1
jax: 0.10.0
libtpu: 0.0.40
codegen_flags: <defaults>
</compile_context>

<pallas_src>
import functools

import jax
import jax.numpy as jnp
from jax import lax
from jax.experimental import pallas as pl
from jax.experimental.pallas import tpu as pltpu


def _round_up(x, m):
    return -(-x // m) * m


def _vmem_capacity_bytes():
    try:
        return int(pltpu.get_tpu_info().vmem_capacity_bytes)
    except Exception:
        return 64 * 1024 * 1024  # conservative default (v7x per-core VMEM)


def _footprint_bytes(tc, thw, K, f_item, p_item):
    """Holistic per-step VMEM footprint (double-buffered blocks + scratch)."""
    k_lane = _round_up(max(K, 1), 128)
    k_sub = _round_up(max(K, 1), 8)
    feats_buf = 2 * tc * thw * f_item            # feats tile, double buffered
    probs_buf = 2 * k_sub * thw * p_item         # probs tile, double buffered
    out_buf = 2 * tc * k_lane * f_item           # (TC, K) output tile
    scratch = tc * k_lane * 4 + 2 * 8 * 128 * 4  # acc + m/l (padded)
    return feats_buf + probs_buf + out_buf + scratch + (1 << 20)


def _pick_tiles(C, K, HW, f_item, p_item, budget):
    """Largest lane-aligned tiles that divide (C, HW) and fit the budget.

    Prefers keeping HW fully resident (probs DMA'd once per batch, exact
    softmax); only tiles HW when it must.
    """
    c_cands = [t for t in (1024, 512, 256, 128) if C % t == 0] or [C]
    hw_cands = [t for t in (65536, 32768, 16384, 8192, 4096, 2048, 1024, 512, 256, 128)
                if HW % t == 0] or [HW]
    if HW not in hw_cands:
        hw_cands.insert(0, HW)

    best = None
    for tc in c_cands:                      # descending
        for thw in hw_cands:                # descending; take largest that fits
            if _footprint_bytes(tc, thw, K, f_item, p_item) > budget:
                continue
            n_c, n_hw = C // tc, HW // thw
            probs_passes = n_c if n_hw > 1 else 1   # probs re-read per C tile when HW is tiled
            traffic = C * HW * f_item + probs_passes * K * HW * p_item
            score = (traffic, n_c * n_hw)
            if best is None or score < best[0]:
                best = (score, tc, thw)
            break
    if best is None:   # nothing fits the budget: best effort, compiler will report
        return c_cands[-1], hw_cands[-1]
    return best[1], best[2]


def _spatial_gather_kernel(probs_ref, feats_ref, out_ref,
                           m_ref, l_ref, acc_ref, *, scale, n_hw):
    # probs_ref: (1, K, THW)   class logits tile for this batch / hw tile
    # feats_ref: (1, TC, THW)  channel x pixel tile of feats (native dtype)
    # out_ref:   (1, TC, K)    matches the consumer layout (B, C, K, 1)
    # m_ref:     (K, 1)  f32   running row max       (online softmax only)
    # l_ref:     (1, K)  f32   running denominator   (online softmax only)
    # acc_ref:   (TC, K) f32   running context       (online softmax only)
    f = feats_ref[0]                                    # (TC, THW)
    p = probs_ref[0].astype(jnp.float32)                # (K, THW), dense vregs
    if scale != 1.0:
        p = p * scale

    if n_hw == 1:
        # HW fully resident: exact softmax, no cross-step state.
        m = jnp.max(p, axis=1, keepdims=True)           # (K, 1)
        e_lp = jnp.exp(p - m).astype(f.dtype)           # (K, THW)
        et = e_lp.T                                     # (THW, K): small XLU transpose
        # Denominator from the same (possibly low-precision) values fed to the
        # MXU so the implied attention rows sum to exactly 1.
        l = jnp.sum(et.astype(jnp.float32), axis=0, keepdims=True)   # (1, K)
        ctx = lax.dot_general(                          # feats is the un-transposed LHS
            f, et, dimension_numbers=(((1,), (0,)), ((), ())),
            preferred_element_type=jnp.float32)         # (TC, K)
        out_ref[0] = (ctx * pl.reciprocal(l, approx=False)).astype(out_ref.dtype)
        return

    # Large feature maps: online softmax across HW tiles.
    hw_i = pl.program_id(2)

    @pl.when(hw_i == 0)
    def _init():
        m_ref[...] = jnp.full_like(m_ref, -jnp.inf)
        l_ref[...] = jnp.zeros_like(l_ref)
        acc_ref[...] = jnp.zeros_like(acc_ref)

    m_prev = m_ref[...]                                 # (K, 1)
    m_new = jnp.maximum(m_prev, jnp.max(p, axis=1, keepdims=True))
    e_lp = jnp.exp(p - m_new).astype(f.dtype)           # (K, THW)
    et = e_lp.T                                         # (THW, K)
    alpha = jnp.exp(m_prev - m_new).reshape(1, -1)      # (1, K): rescale of old state
    l_ref[...] = alpha * l_ref[...] + jnp.sum(
        et.astype(jnp.float32), axis=0, keepdims=True)
    part = lax.dot_general(
        f, et, dimension_numbers=(((1,), (0,)), ((), ())),
        preferred_element_type=jnp.float32)             # (TC, K)
    acc_ref[...] = acc_ref[...] * alpha + part
    m_ref[...] = m_new

    @pl.when(hw_i == n_hw - 1)
    def _finalize():
        inv_l = pl.reciprocal(l_ref[...], approx=False)  # (1, K)
        out_ref[0] = (acc_ref[...] * inv_l).astype(out_ref.dtype)


def spatial_gather(feats, probs, scale=1.0, *, c_tile=None, hw_tile=None,
                   probs_compute_dtype=None):
    """feats: (B, C, H, W), probs: (B, K, H, W) -> (B, C, K, 1)."""
    B, C, H, W = feats.shape
    Bp, K, Hp, Wp = probs.shape
    assert (B, H, W) == (Bp, Hp, Wp), (feats.shape, probs.shape)
    HW = H * W

    # Narrow the probs stream to bf16 for large K (K*HW*4B can be ~40% of the
    # HBM bytes at K=150); worthwhile when the cast fuses into the producer.
    if probs_compute_dtype is None:
        probs_compute_dtype = (jnp.bfloat16
                               if (K >= 64 and probs.dtype == jnp.float32)
                               else probs.dtype)
    probs_flat = probs.reshape(B, K, HW).astype(probs_compute_dtype)
    # feats stays in its native dtype (bf16 from the producer halves the
    # dominant HBM stream on v5e) and feeds the MXU directly.
    feats_flat = feats.reshape(B, C, HW)

    f_item = jnp.dtype(feats.dtype).itemsize
    p_item = jnp.dtype(probs_flat.dtype).itemsize
    vmem_cap = _vmem_capacity_bytes()
    tc_auto, thw_auto = _pick_tiles(C, K, HW, f_item, p_item, int(vmem_cap * 0.70))
    tc = tc_auto if c_tile is None else c_tile
    thw = thw_auto if hw_tile is None else hw_tile
    assert C % tc == 0 and (tc == C or tc % 8 == 0), (C, tc)
    assert HW % thw == 0 and (thw == HW or thw % 128 == 0), (HW, thw)
    n_c, n_hw = C // tc, HW // thw

    need = _footprint_bytes(tc, thw, K, f_item, p_item)
    vmem_limit = int(min(max(need + (8 << 20), 32 << 20), int(vmem_cap * 0.9)))

    kernel = functools.partial(_spatial_gather_kernel, scale=float(scale), n_hw=n_hw)

    cost = pl.CostEstimate(
        flops=int(2 * B * K * HW * C),
        transcendentals=int(B * K * HW * n_c),
        bytes_accessed=int(B * C * HW * f_item
                           + B * K * HW * p_item * (n_c if n_hw > 1 else 1)
                           + B * C * K * f_item),
    )

    out = pl.pallas_call(
        kernel,
        out_shape=jax.ShapeDtypeStruct((B, C, K), feats.dtype),
        grid_spec=pltpu.PrefetchScalarGridSpec(
            num_scalar_prefetch=0,
            grid=(B, n_c, n_hw),
            in_specs=[
                # probs block index is constant across C tiles when n_hw == 1,
                # so it is only DMA'd once per batch element.
                pl.BlockSpec((1, K, thw), lambda b, c, h: (b, 0, h)),
                pl.BlockSpec((1, tc, thw), lambda b, c, h: (b, c, h)),
            ],
            out_specs=pl.BlockSpec((1, tc, K), lambda b, c, h: (b, c, 0)),
            scratch_shapes=[
                pltpu.VMEM((K, 1), jnp.float32),    # running row max
                pltpu.VMEM((1, K), jnp.float32),    # running denominator
                pltpu.VMEM((tc, K), jnp.float32),   # running context accumulator
            ],
        ),
        compiler_params=pltpu.CompilerParams(
            dimension_semantics=("parallel", "parallel", "arbitrary"),
            vmem_limit_bytes=vmem_limit,
        ),
        cost_estimate=cost,
    )(probs_flat, feats_flat)

    # (B, C, K) -> (B, C, K, 1): already in the consumer's layout.
    return out[..., None]


def _reference(feats, probs, scale=1.0):
    B, C, H, W = feats.shape
    K = probs.shape[1]
    p = probs.reshape(B, K, -1)
    f = feats.reshape(B, C, -1).transpose(0, 2, 1)      # (B, HW, C)
    attn = jax.nn.softmax(scale * p, axis=2)            # (B, K, HW)
    ctx = jnp.einsum("bkh,bhc->bkc", attn, f)           # (B, K, C)
    return ctx.transpose(0, 2, 1)[..., None]            # (B, C, K, 1)


if __name__ == "__main__":
    key = jax.random.PRNGKey(0)
    k1, k2, k3, k4 = jax.random.split(key, 4)

    scale = 1.0  # SpatialGatherModule(scale) -- only hyper-parameter, no weights

    # Case 1: small shapes, HW fully resident (exact-softmax path).
    B, C, K, H, W = 2, 32, 8, 16, 16
    feats = jax.random.normal(k1, (B, C, H, W), dtype=jnp.float32)
    probs = jax.random.normal(k2, (B, K, H, W), dtype=jnp.float32)
    out = jax.block_until_ready(spatial_gather(feats, probs, scale=scale))
    ref = _reference(feats, probs, scale=scale)
    assert out.shape == (B, C, K, 1), out.shape
    assert jnp.allclose(out, ref, atol=1e-4, rtol=1e-4), "mismatch (case 1)"

    # Case 2: force channel + HW tiling to exercise the online-softmax path
    # and the cross-step scratch accumulator.
    B2, C2, K2, H2, W2 = 2, 256, 8, 32, 32
    feats2 = jax.random.normal(k3, (B2, C2, H2, W2), dtype=jnp.float32)
    probs2 = jax.random.normal(k4, (B2, K2, H2, W2), dtype=jnp.float32)
    out2 = jax.block_until_ready(
        spatial_gather(feats2, probs2, scale=scale, c_tile=128, hw_tile=256))
    ref2 = _reference(feats2, probs2, scale=scale)
    assert out2.shape == (B2, C2, K2, 1), out2.shape
    assert jnp.allclose(out2, ref2, atol=1e-4, rtol=1e-4), "mismatch (case 2)"

    print("KERNEL_OK")
</pallas_src>

<mosaic_0001>
module attributes {stable_mosaic.version = 11 : i64} {
  func.func @_spatial_gather_kernel(%arg0: i32, %arg1: i32, %arg2: i32, %arg3: memref<1x8x256xf32, #tpu.memory_space<vmem>>, %arg4: memref<1x32x256xf32, #tpu.memory_space<vmem>>, %arg5: memref<1x32x8xf32, #tpu.memory_space<vmem>>, %arg6: memref<8x1xf32, #tpu.memory_space<vmem>>, %arg7: memref<1x8xf32, #tpu.memory_space<vmem>>, %arg8: memref<32x8xf32, #tpu.memory_space<vmem>>) attributes {dimension_semantics = [#tpu.dimension_semantics<parallel>, #tpu.dimension_semantics<parallel>, #tpu.dimension_semantics<arbitrary>], iteration_bounds = array<i64: 2, 1, 1>, scalar_prefetch = 0 : i64, scratch_operands = 3 : i64, tpu.core_type = #tpu.core_type<tc>, window_params = [{transform_indices = @transform_0, window_bounds = array<i64: 1, 8, 256>}, {transform_indices = @transform_1, window_bounds = array<i64: 1, 32, 256>}, {transform_indices = @transform_2, window_bounds = array<i64: 1, 32, 8>}]} {
    %c0 = arith.constant 0 : index
    %c0_0 = arith.constant 0 : index
    %c0_1 = arith.constant 0 : index
    %0 = vector.load %arg4[%c0, %c0_0, %c0_1] : memref<1x32x256xf32, #tpu.memory_space<vmem>>, vector<1x32x256xf32>
    %1 = vector.shape_cast %0 : vector<1x32x256xf32> to vector<32x256xf32>
    %c0_2 = arith.constant 0 : index
    %c0_3 = arith.constant 0 : index
    %c0_4 = arith.constant 0 : index
    %2 = vector.load %arg3[%c0_2, %c0_3, %c0_4] : memref<1x8x256xf32, #tpu.memory_space<vmem>>, vector<1x8x256xf32>
    %3 = vector.shape_cast %2 : vector<1x8x256xf32> to vector<8x256xf32>
    %cst = arith.constant dense<0xFF800000> : vector<8xf32>
    %4 = vector.multi_reduction <maximumf>, %3, %cst [1] : vector<8x256xf32> to vector<8xf32>
    %5 = vector.shape_cast %4 : vector<8xf32> to vector<8x1xf32>
    %6 = vector.broadcast %5 : vector<8x1xf32> to vector<8x256xf32>
    %7 = arith.subf %3, %6 : vector<8x256xf32>
    %8 = math.exp %7 : vector<8x256xf32>
    %9 = tpu.transpose %8, [1, 0] : vector<8x256xf32> -> vector<256x8xf32>
    %cst_5 = arith.constant dense<0.000000e+00> : vector<8xf32>
    %10 = vector.multi_reduction <add>, %9, %cst_5 [0] : vector<256x8xf32> to vector<8xf32>
    %11 = vector.shape_cast %10 : vector<8xf32> to vector<1x8xf32>
    %cst_6 = arith.constant dense<0.000000e+00> : vector<32x8xf32>
    %12 = tpu.matmul %1, %9, %cst_6 {dimension_numbers = #tpu.dot_dimension_numbers<[1], [0], [0], [1], [0, 0, 1, 1], [], []>} : vector<32x256xf32>, vector<256x8xf32>, vector<32x8xf32> -> vector<32x8xf32>
    %13 = tpu.reciprocal %11 : vector<1x8xf32> -> vector<1x8xf32>
    %14 = vector.broadcast %13 : vector<1x8xf32> to vector<32x8xf32>
    %15 = arith.mulf %12, %14 : vector<32x8xf32>
    %c0_7 = arith.constant 0 : index
    %c0_8 = arith.constant 0 : index
    %c0_9 = arith.constant 0 : index
    %16 = vector.load %arg5[%c0_7, %c0_8, %c0_9] : memref<1x32x8xf32, #tpu.memory_space<vmem>>, vector<1x32x8xf32>
    %17 = vector.shape_cast %16 : vector<1x32x8xf32> to vector<32x8xf32>
    %18 = vector.shape_cast %15 : vector<32x8xf32> to vector<1x32x8xf32>
    tpu.vector_store %arg5[%c0_7, %c0_8, %c0_9], %18 {strides = array<i32>} : memref<1x32x8xf32, #tpu.memory_space<vmem>>, vector<1x32x8xf32>,
    return
  }
  func.func @transform_0(%arg0: i32, %arg1: i32, %arg2: i32) -> (i32, i32, i32) {
    %c0_i32 = arith.constant 0 : i32
    %c0_i32_0 = arith.constant 0 : i32
    return %arg0, %c0_i32, %arg2 : i32, i32, i32
  }
  func.func @transform_1(%arg0: i32, %arg1: i32, %arg2: i32) -> (i32, i32, i32) {
    %c0_i32 = arith.constant 0 : i32
    return %arg0, %arg1, %arg2 : i32, i32, i32
  }
  func.func @transform_2(%arg0: i32, %arg1: i32, %arg2: i32) -> (i32, i32, i32) {
    %c0_i32 = arith.constant 0 : i32
    %c0_i32_0 = arith.constant 0 : i32
    return %arg0, %arg1, %c0_i32 : i32, i32, i32
  }
}

</mosaic_0001>

<llo_original>
// kernel: tpu_custom_call.1
$region0: #{tpu_custom_call.1}
  #allocation0 [shape = 'u32[]', space=smem, size = 0x4, offset = 0x4, fixed_abs, tag = 'smem constant byte address 0x4 - core index']
  #allocation1 [shape = 'u32[144,128]{1,0:T(1,128)}', space=vmem, size = 0x12000, scoped, tag = 'internal scratch']
  #allocation2 [shape = 'f32[8,1]{1,0:T(8,128)}', space=vmem, size = 0x1000, scoped, tag = 'scratch operand']
  #allocation3 [shape = 'f32[1,8]{1,0:T(1,128)}', space=vmem, size = 0x200, scoped, tag = 'scratch operand']
  #allocation4 [shape = 'f32[32,8]{1,0:T(8,128)}', space=vmem, size = 0x4000, scoped, tag = 'scratch operand']
  %s0 = inlined_call_operand.hbm [shape: f32[2,8,256], index: 0, kind: input, shape index: {}]
  %s1 = inlined_call_operand.hbm [shape: f32[2,32,256], index: 1, kind: input, shape index: {}]
  %s2 = inlined_call_operand.vmem [shape: f32[2,32,8], index: 2, kind: output, shape index: {}]
  %s3 = sld [smem:[#allocation0]]
  $region49: #{tpu_custom_call.1} parent=0
    _
  %s5 = ssub.s32 1, %s3
  %s6 = scalar_select 0, %s5, %s3
  $region1: #{tpu_custom_call.1} parent=0
    #allocation5 [shape = 'u8[16384]{0}', space=vmem, size = 0x4000, scoped, tag = 'input window, operand 0']
    #allocation6 [shape = 's32[2]{0}', space=sflag, size = 0x8, scoped, tag = 'scoped memory for tpu_custom_call.1']
    #allocation7 [shape = 'u8[65536]{0}', space=vmem, size = 0x10000, scoped, tag = 'input window, operand 1']
    #allocation8 [shape = 's32[2]{0}', space=sflag, size = 0x8, scoped, tag = 'scoped memory for tpu_custom_call.1']
    %7 = vsyncpa [#allocation6], 0
    %s8 = scalar_lea.sflag [#allocation6], 1
    %9 = vsyncpa %s8, 0
    %10 = vsyncpa [#allocation8], 0
    %s11 = scalar_lea.sflag [#allocation8], 1
    %12 = vsyncpa %s11, 0
    loop: start=0, step=1, limit=4
    $region2: #{tpu_custom_call.1} parent=1 // loop_pre_header
      _
    $region3: #{tpu_custom_call.1} parent=1 // loop_header
      %s14 = sphi 0, %s18
      %p15 = scmp.ge.s32.totalorder %s14, 4
      %s21 = sphi 0, %s40
      %s22 = sphi 0, %s36
      %s23 = sphi 0, %s32
      %s24 = sphi 0, %s21
      %s25 = sphi 0, %s22
      %s26 = sphi 0, %s23
      %s27 = sphi 0, %s24
      %s28 = sphi 0, %s25
      %s29 = sphi 0, %s26
      %s45 = sphi 0, %s47
      %s48 = sphi 0, %s45
      %s49 = sphi 0, %s48
      %s65 = sphi 0, %s49
      %s75 = sphi 0, %s77
      %s78 = sphi 0, %s75
      %s79 = sphi 0, %s78
      %s95 = sphi 0, %s79
      %s103 = sphi 0, %s105
      %s106 = sphi 0, %s103
      %s107 = sphi 0, %s106
      %s123 = sphi 0, %s107
    $region4: #{tpu_custom_call.1} parent=1 // loop_header_branch
      %17 = sbr.rel (%p15) target = $region8
    $region5: #{tpu_custom_call.1} parent=1 // loop_body
      %s19 = ssub.s32 %s14, 1
      %s20 = ssub.s32 %s14, 2
      %s30 = sadd.s32 1, %s23
      %p31 = scmp.ge.s32.totalorder %s30, 1
      %s32 = scalar_select %p31, 0, %s30
      %s33 = sadd.s32 1, %s22
      %s34 = scalar_select %p31, %s33, %s22
      %p35 = scmp.ge.s32.totalorder %s34, 1
      %s36 = scalar_select %p35, 0, %s34
      %s37 = sadd.s32 1, %s21
      %s38 = scalar_select %p35, %s37, %s21
      %p39 = scmp.ge.s32.totalorder %s38, 2
      %s40 = scalar_select %p39, 0, %s38
      %s41 = ssub.s32 %s21, %s40
      %s42 = ssub.s32 %s23, %s32
      %s43 = sor.u32 %s41, %s42
      %p44 = scmp.eq.s32.totalorder %s43, 0
      %s46 = sadd.s32 %s45, 1
      %s47 = scalar_select %p44, %s45, %s46
      %p50 = pneg %p44
      %p51 = scmp.eq.s32.totalorder %s14, 1
      %p52 = por %p50, %p51
      %p53 = scmp.ne.s32.totalorder %s45, %s48
      %p54 = scmp.eq.s32.totalorder %s14, 0
      %p55 = por %p53, %p54
      %p56 = scmp.ne.s32.totalorder %s45, %s48
      %p57 = scmp.eq.s32.totalorder %s19, 1
      %p58 = por %p56, %p57
      %p59 = scmp.ne.s32.totalorder %s48, %s49
      %p60 = scmp.eq.s32.totalorder %s19, 0
      %p61 = por %p59, %p60
      %p62 = scmp.ne.s32.totalorder %s48, %s49
      %p63 = scmp.eq.s32.totalorder %s20, 1
      %p64 = por %p62, %p63
      %p66 = scmp.ne.s32.totalorder %s49, %s65
      %p67 = scmp.eq.s32.totalorder %s20, 0
      %p68 = por %p66, %p67
      %s69 = ssub.s32 %s21, %s40
      %s70 = ssub.s32 %s22, %s36
      %s71 = sor.u32 %s69, %s70
      %s72 = ssub.s32 %s23, %s32
      %s73 = sor.u32 %s71, %s72
      %p74 = scmp.eq.s32.totalorder %s73, 0
      %s76 = sadd.s32 %s75, 1
      %s77 = scalar_select %p74, %s75, %s76
      %p80 = pneg %p74
      %p81 = scmp.eq.s32.totalorder %s14, 1
      %p82 = por %p80, %p81
      %p83 = scmp.ne.s32.totalorder %s75, %s78
      %p84 = scmp.eq.s32.totalorder %s14, 0
      %p85 = por %p83, %p84
      %p86 = scmp.ne.s32.totalorder %s75, %s78
      %p87 = scmp.eq.s32.totalorder %s19, 1
      %p88 = por %p86, %p87
      %p89 = scmp.ne.s32.totalorder %s78, %s79
      %p90 = scmp.eq.s32.totalorder %s19, 0
      %p91 = por %p89, %p90
      %p92 = scmp.ne.s32.totalorder %s78, %s79
      %p93 = scmp.eq.s32.totalorder %s20, 1
      %p94 = por %p92, %p93
      %p96 = scmp.ne.s32.totalorder %s79, %s95
      %p97 = scmp.eq.s32.totalorder %s20, 0
      %p98 = por %p96, %p97
      %s99 = ssub.s32 %s21, %s40
      %s100 = ssub.s32 %s22, %s36
      %s101 = sor.u32 %s99, %s100
      %p102 = scmp.eq.s32.totalorder %s101, 0
      %s104 = sadd.s32 %s103, 1
      %s105 = scalar_select %p102, %s103, %s104
      %p108 = pneg %p102
      %p109 = scmp.eq.s32.totalorder %s14, 1
      %p110 = por %p108, %p109
      %p111 = scmp.ne.s32.totalorder %s103, %s106
      %p112 = scmp.eq.s32.totalorder %s14, 0
      %p113 = por %p111, %p112
      %p114 = scmp.ne.s32.totalorder %s103, %s106
      %p115 = scmp.eq.s32.totalorder %s19, 1
      %p116 = por %p114, %p115
      %p117 = scmp.ne.s32.totalorder %s106, %s107
      %p118 = scmp.eq.s32.totalorder %s19, 0
      %p119 = por %p117, %p118
      %p120 = scmp.ne.s32.totalorder %s106, %s107
      %p121 = scmp.eq.s32.totalorder %s20, 1
      %p122 = por %p120, %p121
      %p124 = scmp.ne.s32.totalorder %s107, %s123
      %p125 = scmp.eq.s32.totalorder %s20, 0
      %p126 = por %p124, %p125
      %p127 = scmp.le.s32.totalorder 1, %s14
      %p128 = scmp.lt.s32.totalorder %s14, 3
      %p129 = pnand %p127, %p128
      %p130 = pneg %p129
      // Predicated region
      $region9: #{tpu_custom_call.1} parent=5 // pred_check
        _
      $region10: #{tpu_custom_call.1} parent=5 // pred_check_branch
        %132 = sbr.rel (%p129) target = $region12
      $region11: #{tpu_custom_call.1} parent=5 // pred_region
        %s133 = ssub.s32 %s14, 1
      $region12: #{tpu_custom_call.1} parent=5 // pred_fallthru
        _
      %p134 = scmp.lt.s32.totalorder %s14, 2
      // Predicated region
      $region13: #{tpu_custom_call.1} parent=5 // pred_check
        %p135 = pneg %p134
      $region14: #{tpu_custom_call.1} parent=5 // pred_check_branch
        %137 = sbr.rel (%p135) target = $region16
      $region15: #{tpu_custom_call.1} parent=5 // pred_region
        // Predicated region
        $region17: #{tpu_custom_call.1} parent=15 // pred_check
          %p138 = pneg %p55
        $region18: #{tpu_custom_call.1} parent=15 // pred_check_branch
          %140 = sbr.rel (%p138) target = $region20
        $region19: #{tpu_custom_call.1} parent=15 // pred_region
          %s141 = sand.u32 %s45, 1
          %s142 = scalar_lea.sflag [#allocation6], %s141
          %s143 = sand.u32 %s45, 1
          %s144 = smul.addr %s143, 16
          %s145 = scalar_lea.vmem [#allocation5], %s144
          %s146 = smul.u32 2, %s23
          %s148 = ssub.s32 256, 256
          %149 = vsyncadd %s142, %s148
          %s150 = smul.addr %s21, 2
          %s151 = sadd.s32 %s146, %s150
          %s152 = smul.addr %s151, 128
          %s153 = scalar_lea.hbm %s0, %s152
          %s155 = sshll.u32 %s145, 4
          %s156 = int_to_ptr.vmem [resolvable:$true] %s155
          %158 = dma.hbm_to_vmem [thread:$0]  %s153, 256, %s156, %s142
        $region20: #{tpu_custom_call.1} parent=15 // pred_fallthru
          _
        // Predicated region
        $region21: #{tpu_custom_call.1} parent=15 // pred_check
          %p159 = pneg %p85
        $region22: #{tpu_custom_call.1} parent=15 // pred_check_branch
          %161 = sbr.rel (%p159) target = $region24
        $region23: #{tpu_custom_call.1} parent=15 // pred_region
          %s162 = sand.u32 %s75, 1
          %s163 = scalar_lea.sflag [#allocation8], %s162
          %s164 = sand.u32 %s75, 1
          %s165 = smul.addr %s164, 64
          %s166 = scalar_lea.vmem [#allocation7], %s165
          %s167 = smul.u32 4, %s22
          %s168 = smul.u32 2, %s23
          %s170 = ssub.s32 1024, 1024
          %171 = vsyncadd %s163, %s170
          %s172 = smul.addr %s167, 2
          %s173 = sadd.s32 %s168, %s172
          %s174 = smul.addr %s21, 8
          %s175 = sadd.s32 %s173, %s174
          %s176 = smul.addr %s175, 128
          %s177 = scalar_lea.hbm %s1, %s176
          %s178 = sshll.u32 %s166, 4
          %s179 = int_to_ptr.vmem [resolvable:$true] %s178
          %184 = dma.hbm_to_vmem [thread:$0]  %s177, 1024, %s179, %s163, 256, 256, 16
        $region24: #{tpu_custom_call.1} parent=15 // pred_fallthru
          _
      $region16: #{tpu_custom_call.1} parent=5 // pred_fallthru
        _
      %p185 = scmp.le.s32.totalorder 1, %s14
      %p186 = scmp.lt.s32.totalorder %s14, 3
      %p187 = pnand %p185, %p186
      %p188 = pneg %p187
      // Predicated region
      $region25: #{tpu_custom_call.1} parent=5 // pred_check
        _
      $region26: #{tpu_custom_call.1} parent=5 // pred_check_branch
        %190 = sbr.rel (%p187) target = $region28
      $region27: #{tpu_custom_call.1} parent=5 // pred_region
        %s191 = ssub.s32 %s14, 1
        %s192 = sand.u32 %s48, 1
        %s193 = scalar_lea.sflag [#allocation6], %s192
        %s194 = sand.u32 %s48, 1
        %s195 = smul.addr %s194, 16
        %s196 = scalar_lea.vmem [#allocation5], %s195
        // Predicated region
        $region29: #{tpu_custom_call.1} parent=27 // pred_check
          %p197 = pneg %p61
        $region30: #{tpu_custom_call.1} parent=27 // pred_check_branch
          %199 = sbr.rel (%p197) target = $region32
        $region31: #{tpu_custom_call.1} parent=27 // pred_region
          %200 = dma.done %s193, 256
        $region32: #{tpu_custom_call.1} parent=27 // pred_fallthru
          _
        %s201 = sand.u32 %s78, 1
        %s202 = scalar_lea.sflag [#allocation8], %s201
        %s203 = sand.u32 %s78, 1
        %s204 = smul.addr %s203, 64
        %s205 = scalar_lea.vmem [#allocation7], %s204
        // Predicated region
        $region33: #{tpu_custom_call.1} parent=27 // pred_check
          %p206 = pneg %p91
        $region34: #{tpu_custom_call.1} parent=27 // pred_check_branch
          %208 = sbr.rel (%p206) target = $region36
        $region35: #{tpu_custom_call.1} parent=27 // pred_region
          %209 = dma.done %s202, 1024
        $region36: #{tpu_custom_call.1} parent=27 // pred_fallthru
          _
        %s210 = sand.u32 %s48, 1
        %s211 = scalar_lea.sflag [#allocation6], %s210
        %s212 = sand.u32 %s48, 1
        %s213 = smul.addr %s212, 16
        %s214 = scalar_lea.vmem [#allocation5], %s213
        %p215 = pneg %p61
        %p216 = pneg %p58
        %s217 = sand.u32 %s78, 1
        %s218 = scalar_lea.sflag [#allocation8], %s217
        %s219 = sand.u32 %s78, 1
        %s220 = smul.addr %s219, 64
        %s221 = scalar_lea.vmem [#allocation7], %s220
        %p222 = pneg %p91
        %p223 = pneg %p88
        %p224 = pneg %p119
        %p225 = pneg %p116
        %s226 = smul.u32 4, %s25
        %p227 = scmp.lt.s32.totalorder %s24, 1
        %s228 = scalar_select %p227, %s24, 1
        %p229 = scmp.lt.s32.totalorder %s226, 3
        %s230 = scalar_select %p229, %s226, 3
        %s231 = smul.addr %s228, 4
        %s232 = sadd.s32 %s230, %s231
        %s233 = smul.addr %s232, 8
        %s234 = scalar_lea.vmem %s2, %s233
        %s235 = smul.u32 2, %s26
        %s236 = smul.u32 4, %s25
        %s237 = smul.u32 2, %s26
        %s238 = smul.u32 4, %s25
        %p239 = scmp.lt.s32.totalorder %s24, 1
        %s240 = scalar_select %p239, %s24, 1
        %p241 = scmp.lt.s32.totalorder %s238, 3
        %s242 = scalar_select %p241, %s238, 3
        %s243 = smul.addr %s240, 4
        %s244 = sadd.s32 %s242, %s243
        %s245 = smul.addr %s244, 8
        %s246 = scalar_lea.vmem %s2, %s245
        %s247 = smul.u32 4, %s25
        %v248 = vld [vmem:[%s205] sm:$0xff]
        %v249 = vld [vmem:[%s205 + $0x8] sm:$0xff]
        %v250 = vld [vmem:[%s205 + $0x10] sm:$0xff]
        %v251 = vld [vmem:[%s205 + $0x18] sm:$0xff]
        %v252 = vld [vmem:[%s205 + $0x20] sm:$0xff]
        %v253 = vld [vmem:[%s205 + $0x28] sm:$0xff]
        %v254 = vld [vmem:[%s205 + $0x30] sm:$0xff]
        %v255 = vld [vmem:[%s205 + $0x38] sm:$0xff]
        %v256 = vld [vmem:[%s196] sm:$0xff]
        %v257 = vld [vmem:[%s196 + $0x8] sm:$0xff]
        %v258 = vmax.f32 %v256, %v257
        %259 = vmax.xlane.f32.xlu0 %v258
        %v260 = vpop.xlane.xlu0 %259
        %v261 = vsub.f32 %v256, %v260
        %v262 = vsub.f32 %v257, %v260
        %v263 = vmul.f32 %v261, 1.442695
        %v264 = vpow.pop %v263
        %v265 = vmul.f32 %v262, 1.442695
        %v266 = vpow.pop %v265
        %267 = vxpose.xlu0.b32.start [1/16] %v264, 128
        %268 = vxpose.xlu0.b32.cont [2/16] 0.0, 128
        %269 = vxpose.xlu0.b32.cont [3/16] 0.0, 128
        %270 = vxpose.xlu0.b32.cont [4/16] 0.0, 128
        %271 = vxpose.xlu0.b32.cont [5/16] 0.0, 128
        %272 = vxpose.xlu0.b32.cont [6/16] 0.0, 128
        %273 = vxpose.xlu0.b32.cont [7/16] 0.0, 128
        %274 = vxpose.xlu0.b32.cont [8/16] 0.0, 128
        %275 = vxpose.xlu0.b32.cont [9/16] 0.0, 128
        %276 = vxpose.xlu0.b32.cont [10/16] 0.0, 128
        %277 = vxpose.xlu0.b32.cont [11/16] 0.0, 128
        %278 = vxpose.xlu0.b32.cont [12/16] 0.0, 128
        %279 = vxpose.xlu0.b32.cont [13/16] 0.0, 128
        %280 = vxpose.xlu0.b32.cont [14/16] 0.0, 128
        %281 = vxpose.xlu0.b32.cont [15/16] 0.0, 128
        %282 = vxpose.xlu0.b32.end [16/16] 0.0, 128
        %v283 = vpop.trf.xlu0
        %v284 = vpop.trf.xlu0
        %v285 = vpop.trf.xlu0
        %v286 = vpop.trf.xlu0
        %v287 = vpop.trf.xlu0
        %v288 = vpop.trf.xlu0
        %v289 = vpop.trf.xlu0
        %v290 = vpop.trf.xlu0
        %v291 = vpop.trf.xlu0
        %v292 = vpop.trf.xlu0
        %v293 = vpop.trf.xlu0
        %v294 = vpop.trf.xlu0
        %v295 = vpop.trf.xlu0
        %v296 = vpop.trf.xlu0
        %v297 = vpop.trf.xlu0
        %v298 = vpop.trf.xlu0
        %299 = vxpose.xlu0.b32.start [1/16] %v266, 128
        %300 = vxpose.xlu0.b32.cont [2/16] 0.0, 128
        %301 = vxpose.xlu0.b32.cont [3/16] 0.0, 128
        %302 = vxpose.xlu0.b32.cont [4/16] 0.0, 128
        %303 = vxpose.xlu0.b32.cont [5/16] 0.0, 128
        %304 = vxpose.xlu0.b32.cont [6/16] 0.0, 128
        %305 = vxpose.xlu0.b32.cont [7/16] 0.0, 128
        %306 = vxpose.xlu0.b32.cont [8/16] 0.0, 128
        %307 = vxpose.xlu0.b32.cont [9/16] 0.0, 128
        %308 = vxpose.xlu0.b32.cont [10/16] 0.0, 128
        %309 = vxpose.xlu0.b32.cont [11/16] 0.0, 128
        %310 = vxpose.xlu0.b32.cont [12/16] 0.0, 128
        %311 = vxpose.xlu0.b32.cont [13/16] 0.0, 128
        %312 = vxpose.xlu0.b32.cont [14/16] 0.0, 128
        %313 = vxpose.xlu0.b32.cont [15/16] 0.0, 128
        %314 = vxpose.xlu0.b32.end [16/16] 0.0, 128
        %v315 = vpop.trf.xlu0
        %v316 = vpop.trf.xlu0
        %v317 = vpop.trf.xlu0
        %v318 = vpop.trf.xlu0
        %v319 = vpop.trf.xlu0
        %v320 = vpop.trf.xlu0
        %v321 = vpop.trf.xlu0
        %v322 = vpop.trf.xlu0
        %v323 = vpop.trf.xlu0
        %v324 = vpop.trf.xlu0
        %v325 = vpop.trf.xlu0
        %v326 = vpop.trf.xlu0
        %v327 = vpop.trf.xlu0
        %v328 = vpop.trf.xlu0
        %v329 = vpop.trf.xlu0
        %v330 = vpop.trf.xlu0
        %vm331 = vcmask 64512
        %v332 = vsel %vm331, %v283, 0.0
        %v333 = vsel %vm331, %v284, 0.0
        %v334 = vadd.f32 %v332, %v333
        %v335 = vsel %vm331, %v285, 0.0
        %v336 = vadd.f32 %v334, %v335
        %v337 = vsel %vm331, %v286, 0.0
        %v338 = vadd.f32 %v336, %v337
        %v339 = vsel %vm331, %v287, 0.0
        %v340 = vadd.f32 %v338, %v339
        %v341 = vsel %vm331, %v288, 0.0
        %v342 = vadd.f32 %v340, %v341
        %v343 = vsel %vm331, %v289, 0.0
        %v344 = vadd.f32 %v342, %v343
        %v345 = vsel %vm331, %v290, 0.0
        %v346 = vadd.f32 %v344, %v345
        %v347 = vsel %vm331, %v291, 0.0
        %v348 = vadd.f32 %v346, %v347
        %v349 = vsel %vm331, %v292, 0.0
        %v350 = vadd.f32 %v348, %v349
        %v351 = vsel %vm331, %v293, 0.0
        %v352 = vadd.f32 %v350, %v351
        %v353 = vsel %vm331, %v294, 0.0
        %v354 = vadd.f32 %v352, %v353
        %v355 = vsel %vm331, %v295, 0.0
        %v356 = vadd.f32 %v354, %v355
        %v357 = vsel %vm331, %v296, 0.0
        %v358 = vadd.f32 %v356, %v357
        %v359 = vsel %vm331, %v297, 0.0
        %v360 = vadd.f32 %v358, %v359
        %v361 = vsel %vm331, %v298, 0.0
        %v362 = vadd.f32 %v360, %v361
        %v363 = vsel %vm331, %v315, 0.0
        %v364 = vadd.f32 %v362, %v363
        %v365 = vsel %vm331, %v316, 0.0
        %v366 = vadd.f32 %v364, %v365
        %v367 = vsel %vm331, %v317, 0.0
        %v368 = vadd.f32 %v366, %v367
        %v369 = vsel %vm331, %v318, 0.0
        %v370 = vadd.f32 %v368, %v369
        %v371 = vsel %vm331, %v319, 0.0
        %v372 = vadd.f32 %v370, %v371
        %v373 = vsel %vm331, %v320, 0.0
        %v374 = vadd.f32 %v372, %v373
        %v375 = vsel %vm331, %v321, 0.0
        %v376 = vadd.f32 %v374, %v375
        %v377 = vsel %vm331, %v322, 0.0
        %v378 = vadd.f32 %v376, %v377
        %v379 = vsel %vm331, %v323, 0.0
        %v380 = vadd.f32 %v378, %v379
        %v381 = vsel %vm331, %v324, 0.0
        %v382 = vadd.f32 %v380, %v381
        %v383 = vsel %vm331, %v325, 0.0
        %v384 = vadd.f32 %v382, %v383
        %v385 = vsel %vm331, %v326, 0.0
        %v386 = vadd.f32 %v384, %v385
        %v387 = vsel %vm331, %v327, 0.0
        %v388 = vadd.f32 %v386, %v387
        %v389 = vsel %vm331, %v328, 0.0
        %v390 = vadd.f32 %v388, %v389
        %v391 = vsel %vm331, %v329, 0.0
        %v392 = vadd.f32 %v390, %v391
        %v393 = vsel %vm331, %v330, 0.0
        %v394 = vadd.f32 %v392, %v393
        %v395 = vrot.slane %v394, 4
        %v396 = vadd.f32 %v394, %v395
        %v397 = vrot.slane %v396, 2
        %v398 = vadd.f32 %v396, %v397
        %v399 = vrot.slane %v398, 1
        %v400 = vadd.f32 %v398, %v399
        %401 = vmatprep.subr.mxu0 0.0
        %402 = vmatpush1.msra.mxu0 %v298
        %403 = vmatprep.subr.mxu0 0.0
        %404 = vmatpush1.msra.mxu0 %v297
        %405 = vmatprep.subr.mxu0 0.0
        %406 = vmatpush1.msra.mxu0 %v296
        %407 = vmatprep.subr.mxu0 0.0
        %408 = vmatpush1.msra.mxu0 %v295
        %409 = vmatprep.subr.mxu0 0.0
        %410 = vmatpush1.msra.mxu0 %v294
        %411 = vmatprep.subr.mxu0 0.0
        %412 = vmatpush1.msra.mxu0 %v293
        %413 = vmatprep.subr.mxu0 0.0
        %414 = vmatpush1.msra.mxu0 %v292
        %415 = vmatprep.subr.mxu0 0.0
        %416 = vmatpush1.msra.mxu0 %v291
        %417 = vmatprep.subr.mxu0 0.0
        %418 = vmatpush1.msra.mxu0 %v290
        %419 = vmatprep.subr.mxu0 0.0
        %420 = vmatpush1.msra.mxu0 %v289
        %421 = vmatprep.subr.mxu0 0.0
        %422 = vmatpush1.msra.mxu0 %v288
        %423 = vmatprep.subr.mxu0 0.0
        %424 = vmatpush1.msra.mxu0 %v287
        %425 = vmatprep.subr.mxu0 0.0
        %426 = vmatpush1.msra.mxu0 %v286
        %427 = vmatprep.subr.mxu0 0.0
        %428 = vmatpush1.msra.mxu0 %v285
        %429 = vmatprep.subr.mxu0 0.0
        %430 = vmatpush1.msra.mxu0 %v284
        %431 = vmatprep.subr.mxu0 0.0
        %432 = vmatpush1.msra.mxu0 %v283
        %433 = vmatprep.subr.mxu0 0.0
        %434 = vmatpush2.msra.mxu0 %v330
        %435 = vmatprep.subr.mxu0 0.0
        %436 = vmatpush2.msra.mxu0 %v329
        %437 = vmatprep.subr.mxu0 0.0
        %438 = vmatpush2.msra.mxu0 %v328
        %439 = vmatprep.subr.mxu0 0.0
        %440 = vmatpush2.msra.mxu0 %v327
        %441 = vmatprep.subr.mxu0 0.0
        %442 = vmatpush2.msra.mxu0 %v326
        %443 = vmatprep.subr.mxu0 0.0
        %444 = vmatpush2.msra.mxu0 %v325
        %445 = vmatprep.subr.mxu0 0.0
        %446 = vmatpush2.msra.mxu0 %v324
        %447 = vmatprep.subr.mxu0 0.0
        %448 = vmatpush2.msra.mxu0 %v323
        %449 = vmatprep.subr.mxu0 0.0
        %450 = vmatpush2.msra.mxu0 %v322
        %451 = vmatprep.subr.mxu0 0.0
        %452 = vmatpush2.msra.mxu0 %v321
        %453 = vmatprep.subr.mxu0 0.0
        %454 = vmatpush2.msra.mxu0 %v320
        %455 = vmatprep.subr.mxu0 0.0
        %456 = vmatpush2.msra.mxu0 %v319
        %457 = vmatprep.subr.mxu0 0.0
        %458 = vmatpush2.msra.mxu0 %v318
        %459 = vmatprep.subr.mxu0 0.0
        %460 = vmatpush2.msra.mxu0 %v317
        %461 = vmatprep.subr.mxu0 0.0
        %462 = vmatpush2.msra.mxu0 %v316
        %463 = vmatprep.subr.mxu0 0.0
        %464 = vmatpush2.msra.mxu0 %v315
        %465 = vmatprep.mubr.f32.mxu0 %v249
        %466 = vmatmul.mubr.f32.gmra.mxu0 %v248
        %v467 = vpop.f32.mrf.mxu0
        %v468 = vadd.f32 0.0, %v467
        %v469 = vpop.f32.mrf.mxu0
        %470 = vmatprep.mubr.f32.mxu0 %v251
        %471 = vmatmul.mubr.f32.gmra.mxu0 %v250
        %v472 = vpop.f32.mrf.mxu0
        %v473 = vadd.f32 0.0, %v472
        %v474 = vpop.f32.mrf.mxu0
        %475 = vmatprep.mubr.f32.mxu0 %v253
        %476 = vmatmul.mubr.f32.gmra.mxu0 %v252
        %v477 = vpop.f32.mrf.mxu0
        %v478 = vadd.f32 0.0, %v477
        %v479 = vpop.f32.mrf.mxu0
        %480 = vmatprep.mubr.f32.mxu0 %v255
        %481 = vmatmul.mubr.f32.gmra.mxu0 %v254
        %v482 = vpop.f32.mrf.mxu0
        %v483 = vadd.f32 0.0, %v482
        %v484 = vpop.f32.mrf.mxu0
        %485 = vdwg.mxu0
        %v486 = vrcp.pop %v400
        %v487 = vmul.f32 %v468, %v486
        %v488 = vmul.f32 %v473, %v486
        %v489 = vmul.f32 %v478, %v486
        %v490 = vmul.f32 %v483, %v486
        %491 = vst.msk [vmem:[%s246] sm:$0xff] %vm331, %v487
        %492 = vst.msk [vmem:[%s246 + $0x8] sm:$0xff] %vm331, %v488
        %493 = vst.msk [vmem:[%s246 + $0x10] sm:$0xff] %vm331, %v489
        %494 = vst.msk [vmem:[%s246 + $0x18] sm:$0xff] %vm331, %v490
        %s495 = smul.u32 4, %s25
        %p496 = scmp.lt.s32.totalorder %s24, 1
        %s497 = scalar_select %p496, %s24, 1
        %p498 = scmp.lt.s32.totalorder %s495, 3
        %s499 = scalar_select %p498, %s495, 3
        %s500 = smul.addr %s497, 4
        %s501 = sadd.s32 %s499, %s500
        %s502 = smul.addr %s501, 8
        %s503 = scalar_lea.vmem %s2, %s502
        // Predicated region
        $region37: #{tpu_custom_call.1} parent=27 // pred_check
          %p504 = pneg %p116
        $region38: #{tpu_custom_call.1} parent=27 // pred_check_branch
          %506 = sbr.rel (%p504) target = $region40
        $region39: #{tpu_custom_call.1} parent=27 // pred_region
          %s507 = smul.u32 4, %s25
        $region40: #{tpu_custom_call.1} parent=27 // pred_fallthru
          _
      $region28: #{tpu_custom_call.1} parent=5 // pred_fallthru
        _
      %p508 = scmp.le.s32.totalorder 2, %s14
      // Predicated region
      $region41: #{tpu_custom_call.1} parent=5 // pred_check
        %p509 = pneg %p508
      $region42: #{tpu_custom_call.1} parent=5 // pred_check_branch
        %511 = sbr.rel (%p509) target = $region44
      $region43: #{tpu_custom_call.1} parent=5 // pred_region
        %s512 = ssub.s32 %s14, 2
        // Predicated region
        $region45: #{tpu_custom_call.1} parent=43 // pred_check
          %p513 = pneg %p122
        $region46: #{tpu_custom_call.1} parent=43 // pred_check_branch
          %515 = sbr.rel (%p513) target = $region48
        $region47: #{tpu_custom_call.1} parent=43 // pred_region
          %s516 = smul.u32 4, %s28
          %p517 = scmp.lt.s32.totalorder %s27, 1
          %s518 = scalar_select %p517, %s27, 1
          %p519 = scmp.lt.s32.totalorder %s516, 3
          %s520 = scalar_select %p519, %s516, 3
          %s521 = smul.addr %s518, 4
          %s522 = sadd.s32 %s520, %s521
          %s523 = smul.addr %s522, 8
          %s524 = scalar_lea.vmem %s2, %s523
        $region48: #{tpu_custom_call.1} parent=43 // pred_fallthru
          _
      $region44: #{tpu_custom_call.1} parent=5 // pred_fallthru
        _
    $region6: #{tpu_custom_call.1} parent=1 // loop_footer
      %s18 = sadd.s32 1, %s14
    $region7: #{tpu_custom_call.1} parent=1 // loop_footer_branch
      %13 = sbr.rel target = $region3
    $region8: #{tpu_custom_call.1} parent=1 // loop_exit
      _
    %525 = vsyncpa [#allocation6], 1
    %s526 = scalar_lea.sflag [#allocation6], 1
    %527 = vsyncpa %s526, 1
    %528 = vsyncpa [#allocation8], 1
    %s529 = scalar_lea.sflag [#allocation8], 1
    %530 = vsyncpa %s529, 1

</llo_original>
